<compile_context>
chip_gen: v6e
topology: v6e:2x2x1
jax: 0.10.0
libtpu: 0.0.40
codegen_flags: <defaults>
</compile_context>

<pallas_src>
import functools
import math

import jax
import jax.numpy as jnp
from jax.experimental import pallas as pl
from jax.experimental.pallas import tpu as pltpu


def _round_up(x, m):
    return ((x + m - 1) // m) * m


def _pad_rows(a, rows):
    return jnp.pad(a, ((0, rows - a.shape[0]), (0, 0)))


# ----------------------------------------------------------------------------
# Kernels
# ----------------------------------------------------------------------------
def _mlp_kernel(xi_ref, xj_ref, *refs, num_layers):
    """Fused 'mlp' predictor for one tile of node pairs.

    refs = (w_0, b_0, w_1, b_1, ..., w_{L-1}, b_{L-1}, o_ref)
    w_l : [C_in_l, C_out_l] bf16 (already transposed, torch Linear -> x @ W.T)
    b_l : [1, C_out_l]      f32
    """
    o_ref = refs[-1]
    w_refs = refs[0:-1:2]
    b_refs = refs[1:-1:2]

    # Pair feature: x = x_i * x_j  (f32 elementwise on the VPU).
    h = xi_ref[...] * xj_ref[...]

    for l in range(num_layers):
        # MXU matmul: bf16 inputs, f32 accumulation.
        h = jnp.dot(h.astype(jnp.bfloat16), w_refs[l][...],
                    preferred_element_type=jnp.float32)
        h = h + b_refs[l][...]                 # bias add in f32
        if l < num_layers - 1:
            h = jnp.maximum(h, 0.0)            # ReLU
            # TODO(synk): F.dropout with training=True would need pltpu PRNG;
            # eval-mode (training=False) dropout is the identity.

    o_ref[...] = jax.nn.sigmoid(h).astype(o_ref.dtype)


def _inner_kernel(xi_ref, xj_ref, o_ref):
    """'inner' predictor: sigmoid(sum(x_i * x_j, axis=-1)) for one pair tile."""
    h = xi_ref[...] * xj_ref[...]
    s = jnp.sum(h, axis=-1, keepdims=True)     # XLU cross-lane reduce
    o_ref[...] = jax.nn.sigmoid(s).astype(o_ref.dtype)


# ----------------------------------------------------------------------------
# Wrappers
# ----------------------------------------------------------------------------
def _mlp_forward_pallas(x_i, x_j, params, *, tile_pairs=512):
    B, C_in = x_i.shape
    L = len(params)
    out_channels = params[-1][0].shape[0]

    tile = min(tile_pairs, _round_up(B, 8))
    B_pad = _round_up(B, tile)

    xi_p = _pad_rows(x_i.astype(jnp.float32), B_pad)
    xj_p = _pad_rows(x_j.astype(jnp.float32), B_pad)

    # Transpose weights to [in, out] bf16; biases to [1, out] f32.
    w_ops, b_ops = [], []
    for (w, b) in params:                      # torch layout: w [out, in]
        w_ops.append(w.T.astype(jnp.bfloat16))
        b_ops.append(b.reshape(1, -1).astype(jnp.float32))

    in_specs = [pl.BlockSpec((tile, C_in), lambda i: (i, 0)),
                pl.BlockSpec((tile, C_in), lambda i: (i, 0))]
    operands = [xi_p, xj_p]
    for w_p, b_p in zip(w_ops, b_ops):
        # Full-array blocks with a constant index_map: VMEM-resident weights.
        in_specs.append(pl.BlockSpec(w_p.shape, lambda i: (0, 0)))
        in_specs.append(pl.BlockSpec(b_p.shape, lambda i: (0, 0)))
        operands.extend([w_p, b_p])

    kernel = functools.partial(_mlp_kernel, num_layers=L)
    out = pl.pallas_call(
        kernel,
        out_shape=jax.ShapeDtypeStruct((B_pad, out_channels), jnp.float32),
        grid_spec=pl.GridSpec(
            grid=(B_pad // tile,),
            in_specs=in_specs,
            out_specs=pl.BlockSpec((tile, out_channels), lambda i: (i, 0)),
        ),
        compiler_params=pltpu.CompilerParams(
            dimension_semantics=("parallel",)),
    )(*operands)
    return out[:B, :out_channels]


def _inner_forward_pallas(x_i, x_j, *, tile_pairs=512):
    B, C_in = x_i.shape
    tile = min(tile_pairs, _round_up(B, 8))
    B_pad = _round_up(B, tile)

    xi_p = _pad_rows(x_i.astype(jnp.float32), B_pad)
    xj_p = _pad_rows(x_j.astype(jnp.float32), B_pad)

    out = pl.pallas_call(
        _inner_kernel,
        out_shape=jax.ShapeDtypeStruct((B_pad, 1), jnp.float32),
        grid_spec=pl.GridSpec(
            grid=(B_pad // tile,),
            in_specs=[pl.BlockSpec((tile, C_in), lambda i: (i, 0)),
                      pl.BlockSpec((tile, C_in), lambda i: (i, 0))],
            out_specs=pl.BlockSpec((tile, 1), lambda i: (i, 0)),
        ),
        compiler_params=pltpu.CompilerParams(
            dimension_semantics=("parallel",)),
    )(xi_p, xj_p)
    return out[:B, 0]


def link_predictor_forward(x_i, x_j, params, predictor="mlp"):
    """LinkPredictor.forward in eval mode."""
    if predictor == "mlp":
        return _mlp_forward_pallas(x_i, x_j, params)
    elif predictor == "inner":
        return _inner_forward_pallas(x_i, x_j)
    else:
        raise ValueError(f"unknown predictor: {predictor}")


def link_predictor_ref(x_i, x_j, params, predictor):
    """Pure-JAX f32 reference (mirrors the PyTorch module)."""
    x = x_i * x_j
    if predictor == "mlp":
        for (w, b) in params[:-1]:
            x = jnp.maximum(x @ w.T + b, 0.0)
        w, b = params[-1]
        x = x @ w.T + b
    elif predictor == "inner":
        x = jnp.sum(x, axis=-1)
    return jax.nn.sigmoid(x)


def init_link_predictor_params(key, in_channels, hidden_channels,
                               out_channels, num_layers):
    """torch.nn.Linear default init: U(-1/sqrt(fan_in), 1/sqrt(fan_in))."""
    dims = [in_channels] + [hidden_channels] * (num_layers - 1) + [out_channels]
    params = []
    for l in range(num_layers):
        key, kw, kb = jax.random.split(key, 3)
        fan_in, fan_out = dims[l], dims[l + 1]
        bound = 1.0 / math.sqrt(fan_in)
        w = jax.random.uniform(kw, (fan_out, fan_in), jnp.float32, -bound, bound)
        b = jax.random.uniform(kb, (fan_out,), jnp.float32, -bound, bound)
        params.append((w, b))
    return params


if __name__ == "__main__":
    key = jax.random.PRNGKey(0)

    B = 64               # number of node pairs
    in_channels = 16
    hidden_channels = 32
    out_channels = 1
    num_layers = 3
    dropout = 0.5        # identity in eval mode

    k_i, k_j, k_p = jax.random.split(key, 3)
    x_i = jax.random.normal(k_i, (B, in_channels), jnp.float32)
    x_j = jax.random.normal(k_j, (B, in_channels), jnp.float32)
    params = init_link_predictor_params(k_p, in_channels, hidden_channels,
                                        out_channels, num_layers)

    out_mlp = link_predictor_forward(x_i, x_j, params, predictor="mlp")
    out_inner = link_predictor_forward(x_i, x_j, params, predictor="inner")
    jax.block_until_ready((out_mlp, out_inner))

    ref_mlp = link_predictor_ref(x_i, x_j, params, "mlp")
    ref_inner = link_predictor_ref(x_i, x_j, params, "inner")

    assert out_mlp.shape == (B, out_channels), out_mlp.shape
    assert out_inner.shape == (B,), out_inner.shape
    assert jnp.all(jnp.isfinite(out_mlp)) and jnp.all(jnp.isfinite(out_inner))
    # bf16 MXU inputs with f32 accumulation -> loose tolerance for 'mlp'.
    assert jnp.max(jnp.abs(out_mlp - ref_mlp)) < 3e-2
    assert jnp.max(jnp.abs(out_inner - ref_inner)) < 1e-4
    print("KERNEL_OK")
</pallas_src>

<mosaic_0001>
module attributes {stable_mosaic.version = 11 : i64} {
  func.func @_mlp_kernel(%arg0: i32, %arg1: memref<64x16xf32, #tpu.memory_space<vmem>>, %arg2: memref<64x16xf32, #tpu.memory_space<vmem>>, %arg3: memref<16x32xbf16, #tpu.memory_space<vmem>>, %arg4: memref<1x32xf32, #tpu.memory_space<vmem>>, %arg5: memref<32x32xbf16, #tpu.memory_space<vmem>>, %arg6: memref<1x32xf32, #tpu.memory_space<vmem>>, %arg7: memref<32x1xbf16, #tpu.memory_space<vmem>>, %arg8: memref<1x1xf32, #tpu.memory_space<vmem>>, %arg9: memref<64x1xf32, #tpu.memory_space<vmem>>) attributes {dimension_semantics = [#tpu.dimension_semantics<parallel>], iteration_bounds = array<i64: 1>, scalar_prefetch = 0 : i64, scratch_operands = 0 : i64, tpu.core_type = #tpu.core_type<tc>, window_params = [{transform_indices = @transform_0, window_bounds = array<i64: 64, 16>}, {transform_indices = @transform_1, window_bounds = array<i64: 64, 16>}, {pipeline_mode = #tpu.pipeline_mode<synchronous>, transform_indices = @transform_2, window_bounds = array<i64: 16, 32>}, {pipeline_mode = #tpu.pipeline_mode<synchronous>, transform_indices = @transform_3, window_bounds = array<i64: 1, 32>}, {pipeline_mode = #tpu.pipeline_mode<synchronous>, transform_indices = @transform_4, window_bounds = array<i64: 32, 32>}, {pipeline_mode = #tpu.pipeline_mode<synchronous>, transform_indices = @transform_5, window_bounds = array<i64: 1, 32>}, {pipeline_mode = #tpu.pipeline_mode<synchronous>, transform_indices = @transform_6, window_bounds = array<i64: 32, 1>}, {pipeline_mode = #tpu.pipeline_mode<synchronous>, transform_indices = @transform_7, window_bounds = array<i64: 1, 1>}, {transform_indices = @transform_8, window_bounds = array<i64: 64, 1>}]} {
    %c0 = arith.constant 0 : index
    %c0_0 = arith.constant 0 : index
    %0 = vector.load %arg1[%c0, %c0_0] : memref<64x16xf32, #tpu.memory_space<vmem>>, vector<64x16xf32>
    %c0_1 = arith.constant 0 : index
    %c0_2 = arith.constant 0 : index
    %1 = vector.load %arg2[%c0_1, %c0_2] : memref<64x16xf32, #tpu.memory_space<vmem>>, vector<64x16xf32>
    %2 = arith.mulf %0, %1 : vector<64x16xf32>
    %3 = arith.truncf %2 : vector<64x16xf32> to vector<64x16xbf16>
    %c0_3 = arith.constant 0 : index
    %c0_4 = arith.constant 0 : index
    %4 = vector.load %arg3[%c0_3, %c0_4] : memref<16x32xbf16, #tpu.memory_space<vmem>>, vector<16x32xbf16>
    %cst = arith.constant dense<0.000000e+00> : vector<64x32xf32>
    %5 = tpu.matmul %3, %4, %cst {dimension_numbers = #tpu.dot_dimension_numbers<[1], [0], [0], [1], [0, 0, 1, 1], [], []>} : vector<64x16xbf16>, vector<16x32xbf16>, vector<64x32xf32> -> vector<64x32xf32>
    %c0_5 = arith.constant 0 : index
    %c0_6 = arith.constant 0 : index
    %6 = vector.load %arg4[%c0_5, %c0_6] : memref<1x32xf32, #tpu.memory_space<vmem>>, vector<1x32xf32>
    %7 = vector.broadcast %6 : vector<1x32xf32> to vector<64x32xf32>
    %8 = arith.addf %5, %7 : vector<64x32xf32>
    %cst_7 = arith.constant 0.000000e+00 : f32
    %9 = vector.broadcast %cst_7 : f32 to vector<64x32xf32>
    %10 = arith.maximumf %8, %9 : vector<64x32xf32>
    %11 = arith.truncf %10 : vector<64x32xf32> to vector<64x32xbf16>
    %c0_8 = arith.constant 0 : index
    %c0_9 = arith.constant 0 : index
    %12 = vector.load %arg5[%c0_8, %c0_9] : memref<32x32xbf16, #tpu.memory_space<vmem>>, vector<32x32xbf16>
    %cst_10 = arith.constant dense<0.000000e+00> : vector<64x32xf32>
    %13 = tpu.matmul %11, %12, %cst_10 {dimension_numbers = #tpu.dot_dimension_numbers<[1], [0], [0], [1], [0, 0, 1, 1], [], []>} : vector<64x32xbf16>, vector<32x32xbf16>, vector<64x32xf32> -> vector<64x32xf32>
    %c0_11 = arith.constant 0 : index
    %c0_12 = arith.constant 0 : index
    %14 = vector.load %arg6[%c0_11, %c0_12] : memref<1x32xf32, #tpu.memory_space<vmem>>, vector<1x32xf32>
    %15 = vector.broadcast %14 : vector<1x32xf32> to vector<64x32xf32>
    %16 = arith.addf %13, %15 : vector<64x32xf32>
    %cst_13 = arith.constant 0.000000e+00 : f32
    %17 = vector.broadcast %cst_13 : f32 to vector<64x32xf32>
    %18 = arith.maximumf %16, %17 : vector<64x32xf32>
    %19 = arith.truncf %18 : vector<64x32xf32> to vector<64x32xbf16>
    %c0_14 = arith.constant 0 : index
    %c0_15 = arith.constant 0 : index
    %20 = vector.load %arg7[%c0_14, %c0_15] : memref<32x1xbf16, #tpu.memory_space<vmem>>, vector<32x1xbf16>
    %cst_16 = arith.constant dense<0.000000e+00> : vector<64x1xf32>
    %21 = tpu.matmul %19, %20, %cst_16 {dimension_numbers = #tpu.dot_dimension_numbers<[1], [0], [0], [1], [0, 0, 1, 1], [], []>} : vector<64x32xbf16>, vector<32x1xbf16>, vector<64x1xf32> -> vector<64x1xf32>
    %c0_17 = arith.constant 0 : index
    %c0_18 = arith.constant 0 : index
    %22 = vector.load %arg8[%c0_17, %c0_18] : memref<1x1xf32, #tpu.memory_space<vmem>>, vector<1x1xf32>
    %23 = vector.broadcast %22 : vector<1x1xf32> to vector<64x1xf32>
    %24 = arith.addf %21, %23 : vector<64x1xf32>
    %25 = arith.negf %24 : vector<64x1xf32>
    %26 = math.exp %25 : vector<64x1xf32>
    %cst_19 = arith.constant 1.000000e+00 : f32
    %27 = vector.broadcast %cst_19 : f32 to vector<64x1xf32>
    %28 = arith.addf %27, %26 : vector<64x1xf32>
    %29 = arith.divf %27, %28 : vector<64x1xf32>
    %c0_20 = arith.constant 0 : index
    %c0_21 = arith.constant 0 : index
    %30 = vector.load %arg9[%c0_20, %c0_21] : memref<64x1xf32, #tpu.memory_space<vmem>>, vector<64x1xf32>
    tpu.vector_store %arg9[%c0_20, %c0_21], %29 {strides = array<i32>} : memref<64x1xf32, #tpu.memory_space<vmem>>, vector<64x1xf32>,
    return
  }
  func.func @transform_0(%arg0: i32) -> (i32, i32) {
    %c0_i32 = arith.constant 0 : i32
    %c0_i32_0 = arith.constant 0 : i32
    return %arg0, %c0_i32 : i32, i32
  }
  func.func @transform_1(%arg0: i32) -> (i32, i32) {
    %c0_i32 = arith.constant 0 : i32
    %c0_i32_0 = arith.constant 0 : i32
    return %arg0, %c0_i32 : i32, i32
  }
  func.func @transform_2(%arg0: i32) -> (i32, i32) {
    %c0_i32 = arith.constant 0 : i32
    %c0_i32_0 = arith.constant 0 : i32
    %c0_i32_1 = arith.constant 0 : i32
    return %c0_i32, %c0_i32_0 : i32, i32
  }
  func.func @transform_3(%arg0: i32) -> (i32, i32) {
    %c0_i32 = arith.constant 0 : i32
    %c0_i32_0 = arith.constant 0 : i32
    %c0_i32_1 = arith.constant 0 : i32
    return %c0_i32, %c0_i32_0 : i32, i32
  }
  func.func @transform_4(%arg0: i32) -> (i32, i32) {
    %c0_i32 = arith.constant 0 : i32
    %c0_i32_0 = arith.constant 0 : i32
    %c0_i32_1 = arith.constant 0 : i32
    return %c0_i32, %c0_i32_0 : i32, i32
  }
  func.func @transform_5(%arg0: i32) -> (i32, i32) {
    %c0_i32 = arith.constant 0 : i32
    %c0_i32_0 = arith.constant 0 : i32
    %c0_i32_1 = arith.constant 0 : i32
    return %c0_i32, %c0_i32_0 : i32, i32
  }
  func.func @transform_6(%arg0: i32) -> (i32, i32) {
    %c0_i32 = arith.constant 0 : i32
    %c0_i32_0 = arith.constant 0 : i32
    %c0_i32_1 = arith.constant 0 : i32
    return %c0_i32, %c0_i32_0 : i32, i32
  }
  func.func @transform_7(%arg0: i32) -> (i32, i32) {
    %c0_i32 = arith.constant 0 : i32
    %c0_i32_0 = arith.constant 0 : i32
    %c0_i32_1 = arith.constant 0 : i32
    return %c0_i32, %c0_i32_0 : i32, i32
  }
  func.func @transform_8(%arg0: i32) -> (i32, i32) {
    %c0_i32 = arith.constant 0 : i32
    %c0_i32_0 = arith.constant 0 : i32
    return %arg0, %c0_i32 : i32, i32
  }
}

</mosaic_0001>

<llo_original>
// kernel: tpu_custom_call.1
$region0: #{tpu_custom_call.1}
  #allocation0 [shape = 'u32[]', space=smem, size = 0x4, offset = 0x4, fixed_abs, tag = 'smem constant byte address 0x4 - core index']
  #allocation1 [shape = 'u32[144,128]{1,0:T(1,128)}', space=vmem, size = 0x12000, scoped, tag = 'internal scratch']
  #allocation2 [shape = 'f32[1,1]{1,0:T(1,128)S(1)}', space=vmem, size = 0x200, scoped, tag = 'scoped memory for tpu_custom_call.1']
  %s0 = inlined_call_operand.vmem [shape: f32[64,16], index: 0, kind: input, shape index: {}]
  %s1 = inlined_call_operand.vmem [shape: f32[64,16], index: 1, kind: input, shape index: {}]
  %s2 = inlined_call_operand.vmem [shape: bf16[16,32], index: 2, kind: input, shape index: {}]
  %s3 = inlined_call_operand.vmem [shape: f32[1,32], index: 3, kind: input, shape index: {}]
  %s4 = inlined_call_operand.vmem [shape: bf16[32,32], index: 4, kind: input, shape index: {}]
  %s5 = inlined_call_operand.vmem [shape: f32[1,32], index: 5, kind: input, shape index: {}]
  %s6 = inlined_call_operand.vmem [shape: bf16[32,1], index: 6, kind: input, shape index: {}]
  %s7 = inlined_call_operand.<no memory space> [shape: f32[1,1], index: 7, kind: input, shape index: {}]
  %s8 = inlined_call_operand.vmem [shape: f32[64,1], index: 8, kind: output, shape index: {}]
  %s9 = sld [smem:[#allocation0]]
  $region42: #{tpu_custom_call.1} parent=0
    _
  %s11 = ssub.s32 1, %s9
  %s12 = scalar_select 0, %s11, %s9
  %v13 = vstv %s7
  %14 = vst [vmem:[#allocation2] sm:$0x1] %v13
  // Predicated region
  $region2: #{tpu_custom_call.1} parent=0 // pred_check
    _
  $region3: #{tpu_custom_call.1} parent=0 // pred_check_branch
    %16 = sbr.rel (0) target = $region5
  $region4: #{tpu_custom_call.1} parent=0 // pred_region
    _
  $region5: #{tpu_custom_call.1} parent=0 // pred_fallthru
    _
  // Predicated region
  $region6: #{tpu_custom_call.1} parent=0 // pred_check
    _
  $region7: #{tpu_custom_call.1} parent=0 // pred_check_branch
    %18 = sbr.rel (0) target = $region9
  $region8: #{tpu_custom_call.1} parent=0 // pred_region
    _
  $region9: #{tpu_custom_call.1} parent=0 // pred_fallthru
    _
  // Predicated region
  $region10: #{tpu_custom_call.1} parent=0 // pred_check
    _
  $region11: #{tpu_custom_call.1} parent=0 // pred_check_branch
    %20 = sbr.rel (0) target = $region13
  $region12: #{tpu_custom_call.1} parent=0 // pred_region
    _
  $region13: #{tpu_custom_call.1} parent=0 // pred_fallthru
    _
  // Predicated region
  $region14: #{tpu_custom_call.1} parent=0 // pred_check
    _
  $region15: #{tpu_custom_call.1} parent=0 // pred_check_branch
    %22 = sbr.rel (0) target = $region17
  $region16: #{tpu_custom_call.1} parent=0 // pred_region
    _
  $region17: #{tpu_custom_call.1} parent=0 // pred_fallthru
    _
  // Predicated region
  $region18: #{tpu_custom_call.1} parent=0 // pred_check
    _
  $region19: #{tpu_custom_call.1} parent=0 // pred_check_branch
    %24 = sbr.rel (0) target = $region21
  $region20: #{tpu_custom_call.1} parent=0 // pred_region
    _
  $region21: #{tpu_custom_call.1} parent=0 // pred_fallthru
    _
  // Predicated region
  $region22: #{tpu_custom_call.1} parent=0 // pred_check
    _
  $region23: #{tpu_custom_call.1} parent=0 // pred_check_branch
    %26 = sbr.rel (0) target = $region25
  $region24: #{tpu_custom_call.1} parent=0 // pred_region
    _
  $region25: #{tpu_custom_call.1} parent=0 // pred_fallthru
    _
  // Predicated region
  $region26: #{tpu_custom_call.1} parent=0 // pred_check
    _
  $region27: #{tpu_custom_call.1} parent=0 // pred_check_branch
    %28 = sbr.rel (0) target = $region29
  $region28: #{tpu_custom_call.1} parent=0 // pred_region
    _
  $region29: #{tpu_custom_call.1} parent=0 // pred_fallthru
    _
  // Predicated region
  $region30: #{tpu_custom_call.1} parent=0 // pred_check
    _
  $region31: #{tpu_custom_call.1} parent=0 // pred_check_branch
    %30 = sbr.rel (0) target = $region33
  $region32: #{tpu_custom_call.1} parent=0 // pred_region
    _
  $region33: #{tpu_custom_call.1} parent=0 // pred_fallthru
    _
  %v32 = vld [vmem:[%s0] sm:$0xff]
  %v33 = vld [vmem:[%s0 + $0x8] sm:$0xff]
  %v34 = vld [vmem:[%s0 + $0x10] sm:$0xff]
  %v35 = vld [vmem:[%s0 + $0x18] sm:$0xff]
  %v36 = vld [vmem:[%s0 + $0x20] sm:$0xff]
  %v37 = vld [vmem:[%s0 + $0x28] sm:$0xff]
  %v38 = vld [vmem:[%s0 + $0x30] sm:$0xff]
  %v39 = vld [vmem:[%s0 + $0x38] sm:$0xff]
  %v40 = vld [vmem:[%s1] sm:$0xff]
  %v41 = vld [vmem:[%s1 + $0x8] sm:$0xff]
  %v42 = vld [vmem:[%s1 + $0x10] sm:$0xff]
  %v43 = vld [vmem:[%s1 + $0x18] sm:$0xff]
  %v44 = vld [vmem:[%s1 + $0x20] sm:$0xff]
  %v45 = vld [vmem:[%s1 + $0x28] sm:$0xff]
  %v46 = vld [vmem:[%s1 + $0x30] sm:$0xff]
  %v47 = vld [vmem:[%s1 + $0x38] sm:$0xff]
  %v48 = vmul.f32 %v32, %v40
  %v49 = vmul.f32 %v33, %v41
  %v50 = vmul.f32 %v34, %v42
  %v51 = vmul.f32 %v35, %v43
  %v52 = vmul.f32 %v36, %v44
  %v53 = vmul.f32 %v37, %v45
  %v54 = vmul.f32 %v38, %v46
  %v55 = vmul.f32 %v39, %v47
  %v56 = vpack.c.bf16 %v49, %v48
  %v57 = vpack.c.bf16 %v51, %v50
  %v58 = vpack.c.bf16 %v53, %v52
  %v59 = vpack.c.bf16 %v55, %v54
  %v60 = vld [vmem:[%s2] sm:$0xf]
  %v61 = vld [vmem:[%s2 + $0x4] sm:$0xf]
  %v62 = vld [vmem:[%s3] sm:$0x1]
  %v64 = vlaneseq
  %v65 = vshrl.u32 %v64, 7
  %v66 = vsub.s32 0, %v65
  %v67 = vrot.slane %v62, %v66
  %v71 = vunpack.c.l.b16 %v60
  %v72 = vunpack.c.l.b16 %v61
  %v73 = vpack.c.b16 %v72, %v71
  %vm75 = vcmask 130048
  %v77 = vsel %vm75, %v56, 0
  %v80 = vsel %vm75, %v57, 0
  %v83 = vsel %vm75, %v58, 0
  %v86 = vsel %vm75, %v59, 0
  %88 = vmatprep.subr.bf16.mxu0 0
  %89 = vmatpush1.bf16.msra.mxu0 0
  %90 = vmatprep.subr.bf16.mxu0 0
  %91 = vmatpush1.bf16.msra.mxu0 0
  %92 = vmatprep.subr.bf16.mxu0 0
  %93 = vmatpush1.bf16.msra.mxu0 0
  %94 = vmatprep.subr.bf16.mxu0 0
  %95 = vmatpush1.bf16.msra.mxu0 0
  %96 = vmatprep.subr.bf16.mxu0 0
  %97 = vmatpush1.bf16.msra.mxu0 0
  %98 = vmatprep.subr.bf16.mxu0 0
  %99 = vmatpush1.bf16.msra.mxu0 0
  %100 = vmatprep.subr.bf16.mxu0 0
  %101 = vmatpush1.bf16.msra.mxu0 0
  %102 = vmatprep.subr.bf16.mxu0 0
  %103 = vmatpush1.bf16.msra.mxu0 %v73
  %104 = vmatprep.subr.bf16.mxu0 0
  %105 = vmatpush2.bf16.msra.mxu0 0
  %106 = vmatprep.subr.bf16.mxu0 0
  %107 = vmatpush2.bf16.msra.mxu0 0
  %108 = vmatprep.subr.bf16.mxu0 0
  %109 = vmatpush2.bf16.msra.mxu0 0
  %110 = vmatprep.subr.bf16.mxu0 0
  %111 = vmatpush2.bf16.msra.mxu0 0
  %112 = vmatprep.subr.bf16.mxu0 0
  %113 = vmatpush2.bf16.msra.mxu0 0
  %114 = vmatprep.subr.bf16.mxu0 0
  %115 = vmatpush2.bf16.msra.mxu0 0
  %116 = vmatprep.subr.bf16.mxu0 0
  %117 = vmatpush2.bf16.msra.mxu0 0
  %118 = vmatprep.subr.bf16.mxu0 0
  %119 = vmatpush2.bf16.msra.mxu0 0
  %120 = vmatprep.mubr.bf16.mxu0 0
  %121 = vmatmul.mubr.bf16.gmra.mxu0 %v77
  %v122 = vpop.f32.mrf.mxu0
  %v123 = vadd.f32 %v67, %v122
  %v124 = vpop.f32.mrf.mxu0
  %v125 = vpop.f32.mrf.mxu0
  %v126 = vadd.f32 %v67, %v125
  %v127 = vpop.f32.mrf.mxu0
  %128 = vmatprep.mubr.bf16.mxu0 0
  %129 = vmatmul.mubr.bf16.gmra.mxu0 %v80
  %v130 = vpop.f32.mrf.mxu0
  %v131 = vadd.f32 %v67, %v130
  %v132 = vpop.f32.mrf.mxu0
  %v133 = vpop.f32.mrf.mxu0
  %v134 = vadd.f32 %v67, %v133
  %v135 = vpop.f32.mrf.mxu0
  %136 = vmatprep.mubr.bf16.mxu0 0
  %137 = vmatmul.mubr.bf16.gmra.mxu0 %v83
  %v138 = vpop.f32.mrf.mxu0
  %v139 = vadd.f32 %v67, %v138
  %v140 = vpop.f32.mrf.mxu0
  %v141 = vpop.f32.mrf.mxu0
  %v142 = vadd.f32 %v67, %v141
  %v143 = vpop.f32.mrf.mxu0
  %144 = vmatprep.mubr.bf16.mxu0 0
  %145 = vmatmul.mubr.bf16.gmra.mxu0 %v86
  %v146 = vpop.f32.mrf.mxu0
  %v147 = vadd.f32 %v67, %v146
  %v148 = vpop.f32.mrf.mxu0
  %v149 = vpop.f32.mrf.mxu0
  %v150 = vadd.f32 %v67, %v149
  %v151 = vpop.f32.mrf.mxu0
  %152 = vdwg.mxu0
  %v153 = vmax.f32 %v123, 0.0
  %v154 = vmax.f32 %v126, 0.0
  %v155 = vmax.f32 %v131, 0.0
  %v156 = vmax.f32 %v134, 0.0
  %v157 = vmax.f32 %v139, 0.0
  %v158 = vmax.f32 %v142, 0.0
  %v159 = vmax.f32 %v147, 0.0
  %v160 = vmax.f32 %v150, 0.0
  %v161 = vpack.c.bf16 %v154, %v153
  %v162 = vpack.c.bf16 %v156, %v155
  %v163 = vpack.c.bf16 %v158, %v157
  %v164 = vpack.c.bf16 %v160, %v159
  %v165 = vld [vmem:[%s4] sm:$0xf]
  %v166 = vld [vmem:[%s4 + $0x4] sm:$0xf]
  %v167 = vld [vmem:[%s4 + $0x8] sm:$0xf]
  %v168 = vld [vmem:[%s4 + $0xc] sm:$0xf]
  %v169 = vld [vmem:[%s5] sm:$0x1]
  %v171 = vlaneseq
  %v172 = vshrl.u32 %v171, 7
  %v173 = vsub.s32 0, %v172
  %v174 = vrot.slane %v169, %v173
  %v180 = vunpack.c.l.b16 %v165
  %v181 = vunpack.c.l.b16 %v166
  %v182 = vunpack.c.l.b16 %v167
  %v183 = vunpack.c.l.b16 %v168
  %v184 = vpack.c.b16 %v181, %v180
  %v185 = vpack.c.b16 %v183, %v182
  %vm188 = vcmask 261120
  %v190 = vsel %vm188, %v161, 0
  %v193 = vsel %vm188, %v162, 0
  %v196 = vsel %vm188, %v163, 0
  %v199 = vsel %vm188, %v164, 0
  %201 = vmatprep.subr.bf16.mxu0 0
  %202 = vmatpush1.bf16.msra.mxu0 0
  %203 = vmatprep.subr.bf16.mxu0 0
  %204 = vmatpush1.bf16.msra.mxu0 0
  %205 = vmatprep.subr.bf16.mxu0 0
  %206 = vmatpush1.bf16.msra.mxu0 0
  %207 = vmatprep.subr.bf16.mxu0 0
  %208 = vmatpush1.bf16.msra.mxu0 0
  %209 = vmatprep.subr.bf16.mxu0 0
  %210 = vmatpush1.bf16.msra.mxu0 0
  %211 = vmatprep.subr.bf16.mxu0 0
  %212 = vmatpush1.bf16.msra.mxu0 0
  %213 = vmatprep.subr.bf16.mxu0 0
  %214 = vmatpush1.bf16.msra.mxu0 %v185
  %215 = vmatprep.subr.bf16.mxu0 0
  %216 = vmatpush1.bf16.msra.mxu0 %v184
  %217 = vmatprep.subr.bf16.mxu0 0
  %218 = vmatpush2.bf16.msra.mxu0 0
  %219 = vmatprep.subr.bf16.mxu0 0
  %220 = vmatpush2.bf16.msra.mxu0 0
  %221 = vmatprep.subr.bf16.mxu0 0
  %222 = vmatpush2.bf16.msra.mxu0 0
  %223 = vmatprep.subr.bf16.mxu0 0
  %224 = vmatpush2.bf16.msra.mxu0 0
  %225 = vmatprep.subr.bf16.mxu0 0
  %226 = vmatpush2.bf16.msra.mxu0 0
  %227 = vmatprep.subr.bf16.mxu0 0
  %228 = vmatpush2.bf16.msra.mxu0 0
  %229 = vmatprep.subr.bf16.mxu0 0
  %230 = vmatpush2.bf16.msra.mxu0 0
  %231 = vmatprep.subr.bf16.mxu0 0
  %232 = vmatpush2.bf16.msra.mxu0 0
  %233 = vmatprep.mubr.bf16.mxu0 0
  %234 = vmatmul.mubr.bf16.gmra.mxu0 %v190
  %v235 = vpop.f32.mrf.mxu0
  %v236 = vadd.f32 %v174, %v235
  %v237 = vpop.f32.mrf.mxu0
  %v238 = vpop.f32.mrf.mxu0
  %v239 = vadd.f32 %v174, %v238
  %v240 = vpop.f32.mrf.mxu0
  %241 = vmatprep.mubr.bf16.mxu0 0
  %242 = vmatmul.mubr.bf16.gmra.mxu0 %v193
  %v243 = vpop.f32.mrf.mxu0
  %v244 = vadd.f32 %v174, %v243
  %v245 = vpop.f32.mrf.mxu0
  %v246 = vpop.f32.mrf.mxu0
  %v247 = vadd.f32 %v174, %v246
  %v248 = vpop.f32.mrf.mxu0
  %249 = vmatprep.mubr.bf16.mxu0 0
  %250 = vmatmul.mubr.bf16.gmra.mxu0 %v196
  %v251 = vpop.f32.mrf.mxu0
  %v252 = vadd.f32 %v174, %v251
  %v253 = vpop.f32.mrf.mxu0
  %v254 = vpop.f32.mrf.mxu0
  %v255 = vadd.f32 %v174, %v254
  %v256 = vpop.f32.mrf.mxu0
  %257 = vmatprep.mubr.bf16.mxu0 0
  %258 = vmatmul.mubr.bf16.gmra.mxu0 %v199
  %v259 = vpop.f32.mrf.mxu0
  %v260 = vadd.f32 %v174, %v259
  %v261 = vpop.f32.mrf.mxu0
  %v262 = vpop.f32.mrf.mxu0
  %v263 = vadd.f32 %v174, %v262
  %v264 = vpop.f32.mrf.mxu0
  %265 = vdwg.mxu0
  %v266 = vmax.f32 %v236, 0.0
  %v267 = vmax.f32 %v239, 0.0
  %v268 = vmax.f32 %v244, 0.0
  %v269 = vmax.f32 %v247, 0.0
  %v270 = vmax.f32 %v252, 0.0
  %v271 = vmax.f32 %v255, 0.0
  %v272 = vmax.f32 %v260, 0.0
  %v273 = vmax.f32 %v263, 0.0
  %v274 = vpack.c.bf16 %v267, %v266
  %v275 = vpack.c.bf16 %v269, %v268
  %v276 = vpack.c.bf16 %v271, %v270
  %v277 = vpack.c.bf16 %v273, %v272
  %v278 = vld [vmem:[%s6] sm:$0xf]
  %v279 = vld [vmem:[%s6 + $0x4] sm:$0xf]
  %v280 = vld [vmem:[%s6 + $0x8] sm:$0xf]
  %v281 = vld [vmem:[%s6 + $0xc] sm:$0xf]
  %v282 = vld [vmem:[#allocation2] sm:$0x1]
  %v284 = vlaneseq
  %v285 = vshrl.u32 %v284, 7
  %v286 = vsub.s32 0, %v285
  %v287 = vrot.slane %v282, %v286
  %v293 = vunpack.c.l.b16 %v278
  %v294 = vunpack.c.l.b16 %v279
  %v295 = vunpack.c.l.b16 %v280
  %v296 = vunpack.c.l.b16 %v281
  %v297 = vpack.c.b16 %v294, %v293
  %v298 = vpack.c.b16 %v296, %v295
  %v302 = vsel %vm188, %v274, 0
  %v305 = vsel %vm188, %v275, 0
  %v308 = vsel %vm188, %v276, 0
  %v311 = vsel %vm188, %v277, 0
  %313 = vmatprep.subr.bf16.mxu0 0
  %314 = vmatpush1.bf16.msra.mxu0 0
  %315 = vmatprep.subr.bf16.mxu0 0
  %316 = vmatpush1.bf16.msra.mxu0 0
  %317 = vmatprep.subr.bf16.mxu0 0
  %318 = vmatpush1.bf16.msra.mxu0 0
  %319 = vmatprep.subr.bf16.mxu0 0
  %320 = vmatpush1.bf16.msra.mxu0 0
  %321 = vmatprep.subr.bf16.mxu0 0
  %322 = vmatpush1.bf16.msra.mxu0 0
  %323 = vmatprep.subr.bf16.mxu0 0
  %324 = vmatpush1.bf16.msra.mxu0 0
  %325 = vmatprep.subr.bf16.mxu0 0
  %326 = vmatpush1.bf16.msra.mxu0 %v298
  %327 = vmatprep.subr.bf16.mxu0 0
  %328 = vmatpush1.bf16.msra.mxu0 %v297
  %329 = vmatprep.subr.bf16.mxu0 0
  %330 = vmatpush2.bf16.msra.mxu0 0
  %331 = vmatprep.subr.bf16.mxu0 0
  %332 = vmatpush2.bf16.msra.mxu0 0
  %333 = vmatprep.subr.bf16.mxu0 0
  %334 = vmatpush2.bf16.msra.mxu0 0
  %335 = vmatprep.subr.bf16.mxu0 0
  %336 = vmatpush2.bf16.msra.mxu0 0
  %337 = vmatprep.subr.bf16.mxu0 0
  %338 = vmatpush2.bf16.msra.mxu0 0
  %339 = vmatprep.subr.bf16.mxu0 0
  %340 = vmatpush2.bf16.msra.mxu0 0
  %341 = vmatprep.subr.bf16.mxu0 0
  %342 = vmatpush2.bf16.msra.mxu0 0
  %343 = vmatprep.subr.bf16.mxu0 0
  %344 = vmatpush2.bf16.msra.mxu0 0
  %345 = vmatprep.mubr.bf16.mxu0 0
  %346 = vmatmul.mubr.bf16.gmra.mxu0 %v302
  %v347 = vpop.f32.mrf.mxu0
  %v348 = vadd.f32 %v287, %v347
  %v349 = vpop.f32.mrf.mxu0
  %v350 = vpop.f32.mrf.mxu0
  %v351 = vadd.f32 %v287, %v350
  %v352 = vpop.f32.mrf.mxu0
  %353 = vmatprep.mubr.bf16.mxu0 0
  %354 = vmatmul.mubr.bf16.gmra.mxu0 %v305
  %v355 = vpop.f32.mrf.mxu0
  %v356 = vadd.f32 %v287, %v355
  %v357 = vpop.f32.mrf.mxu0
  %v358 = vpop.f32.mrf.mxu0
  %v359 = vadd.f32 %v287, %v358
  %v360 = vpop.f32.mrf.mxu0
  %361 = vmatprep.mubr.bf16.mxu0 0
  %362 = vmatmul.mubr.bf16.gmra.mxu0 %v308
  %v363 = vpop.f32.mrf.mxu0
  %v364 = vadd.f32 %v287, %v363
  %v365 = vpop.f32.mrf.mxu0
  %v366 = vpop.f32.mrf.mxu0
  %v367 = vadd.f32 %v287, %v366
  %v368 = vpop.f32.mrf.mxu0
  %369 = vmatprep.mubr.bf16.mxu0 0
  %370 = vmatmul.mubr.bf16.gmra.mxu0 %v311
  %v371 = vpop.f32.mrf.mxu0
  %v372 = vadd.f32 %v287, %v371
  %v373 = vpop.f32.mrf.mxu0
  %v374 = vpop.f32.mrf.mxu0
  %v375 = vadd.f32 %v287, %v374
  %v376 = vpop.f32.mrf.mxu0
  %377 = vdwg.mxu0
  %v378 = vxor.u32 %v348, 2147483648
  %v379 = vxor.u32 %v351, 2147483648
  %v380 = vxor.u32 %v356, 2147483648
  %v381 = vxor.u32 %v359, 2147483648
  %v382 = vxor.u32 %v364, 2147483648
  %v383 = vxor.u32 %v367, 2147483648
  %v384 = vxor.u32 %v372, 2147483648
  %v385 = vxor.u32 %v375, 2147483648
  %v386 = vmul.f32 %v378, 1.442695
  %v387 = vpow.pop %v386
  %v388 = vmul.f32 %v379, 1.442695
  %v389 = vpow.pop %v388
  %v390 = vmul.f32 %v380, 1.442695
  %v391 = vpow.pop %v390
  %v392 = vmul.f32 %v381, 1.442695
  %v393 = vpow.pop %v392
  %v394 = vmul.f32 %v382, 1.442695
  %v395 = vpow.pop %v394
  %v396 = vmul.f32 %v383, 1.442695
  %v397 = vpow.pop %v396
  %v398 = vmul.f32 %v384, 1.442695
  %v399 = vpow.pop %v398
  %v400 = vmul.f32 %v385, 1.442695
  %v401 = vpow.pop %v400
  %v402 = vadd.f32 %v387, 1.0
  %v403 = vadd.f32 %v389, 1.0
  %v404 = vadd.f32 %v391, 1.0
  %v405 = vadd.f32 %v393, 1.0
  %v406 = vadd.f32 %v395, 1.0
  %v407 = vadd.f32 %v397, 1.0
  %v408 = vadd.f32 %v399, 1.0
  %v409 = vadd.f32 %v401, 1.0
  %v410 = vrcp.pop %v402
  %v411 = vmul.f32 1.0, %v410
  %v412 = vrcp.pop %v403
  %v413 = vmul.f32 1.0, %v412
  %v414 = vrcp.pop %v404
  %v415 = vmul.f32 1.0, %v414
  %v416 = vrcp.pop %v405
  %v417 = vmul.f32 1.0, %v416
  %v418 = vrcp.pop %v406
  %v419 = vmul.f32 1.0, %v418
  %v420 = vrcp.pop %v407
  %v421 = vmul.f32 1.0, %v420
  %v422 = vrcp.pop %v408
  %v423 = vmul.f32 1.0, %v422
  %v424 = vrcp.pop %v409
  %v425 = vmul.f32 1.0, %v424
  %vm426 = vcmask 7168
  %427 = vst.msk [vmem:[%s8] sm:$0xff] %vm426, %v411
  %428 = vst.msk [vmem:[%s8 + $0x8] sm:$0xff] %vm426, %v413
  %429 = vst.msk [vmem:[%s8 + $0x10] sm:$0xff] %vm426, %v415
  %430 = vst.msk [vmem:[%s8 + $0x18] sm:$0xff] %vm426, %v417
  %431 = vst.msk [vmem:[%s8 + $0x20] sm:$0xff] %vm426, %v419
  %432 = vst.msk [vmem:[%s8 + $0x28] sm:$0xff] %vm426, %v421
  %433 = vst.msk [vmem:[%s8 + $0x30] sm:$0xff] %vm426, %v423
  %434 = vst.msk [vmem:[%s8 + $0x38] sm:$0xff] %vm426, %v425
  // Predicated region
  $region34: #{tpu_custom_call.1} parent=0 // pred_check
    _
  $region35: #{tpu_custom_call.1} parent=0 // pred_check_branch
    %436 = sbr.rel (0) target = $region37
  $region36: #{tpu_custom_call.1} parent=0 // pred_region
    _
  $region37: #{tpu_custom_call.1} parent=0 // pred_fallthru
    _
  // Predicated region
  $region38: #{tpu_custom_call.1} parent=0 // pred_check
    _
  $region39: #{tpu_custom_call.1} parent=0 // pred_check_branch
    %438 = sbr.rel (0) target = $region41
  $region40: #{tpu_custom_call.1} parent=0 // pred_region
    _
  $region41: #{tpu_custom_call.1} parent=0 // pred_fallthru
    _

</llo_original>
